<compile_context>
chip_gen: v7x
topology: tpu7x:2x2x1
jax: 0.10.0
libtpu: 0.0.40
codegen_flags: <defaults>
</compile_context>

<pallas_src>
import functools
import math

import jax
import jax.numpy as jnp
from jax.experimental import pallas as pl
from jax.experimental.pallas import tpu as pltpu


def fused_conv_kernel(x_ref, w_ref, b_ref, o_ref, im_ref, *, K, C, Wcols, TILE_M, n_m):
    # x_ref : (C, Tin)        bf16  one zero-padded image, flattened (row stride = Wcols)
    # w_ref : (O, K*K*C)      bf16  weight-normed filters, contraction axis (dy,dx,c)-major
    # b_ref : (O, 1)          f32   bias
    # o_ref : (O, TILE_M)     bf16  output lanes [m*TILE_M, (m+1)*TILE_M) of this image
    # im_ref: (K*K*C, TILE_M) bf16  VMEM im2col scratch
    if n_m == 1:
        base = 0                                      # static slice starts for the 1-tile case
    else:
        base = pl.multiple_of(pl.program_id(1) * TILE_M, 128)

    # Build the im2col scratch: each shifted slice of the flattened padded image
    # is materialized exactly once (constant lane offsets; no gather, no reshape).
    for dy in range(K):
        for dx in range(K):
            kk = dy * K + dx
            im_ref[pl.ds(kk * C, C), :] = x_ref[:, pl.ds(base + dy * Wcols + dx, TILE_M)]

    # Single MXU contraction over K*K*C with f32 accumulate; bias folded in with one add.
    acc = jnp.dot(w_ref[...], im_ref[...], preferred_element_type=jnp.float32)
    acc = acc + b_ref[...]

    # LeakyReLU(0.2) in f32.
    y = jnp.where(acc >= 0.0, acc, 0.2 * acc)
    # Pixelwise feature norm over channels (sublane axis); rsqrt runs on the EUP.
    inv = jax.lax.rsqrt(jnp.mean(y * y, axis=0, keepdims=True) + 1e-8)
    o_ref[...] = (y * inv).astype(o_ref.dtype)


def conv_convt_forward(x, v, g, b, *, stride=1, pad=True):
    """x: (N, C, H, W) f32.  v: (O, C, K, K) weight-norm direction.
    g: (O,) magnitude.  b: (O,) bias.  Returns (N, O, Ho, Wo) bf16."""
    if stride != 1:
        raise NotImplementedError("TODO(synk): stride > 1 not implemented")
    N, C, H, W = x.shape
    O, _, K, _ = v.shape
    p = K // 2 if pad else 0
    Ho = H + 2 * p - K + 1
    Wo = W + 2 * p - K + 1
    Wp = W + 2 * p                                     # real padded width

    # Lane-dense flattened spatial: widen the padded row width so Ho*Wcols is a
    # multiple of 128 (unmasked full-lane output stores). Extra columns are junk
    # and are cropped in the wrapper.
    lane_q = 128 // math.gcd(Ho, 128)
    Wcols = ((Wp + lane_q - 1) // lane_q) * lane_q
    Mout = Ho * Wcols                                  # multiple of 128 by construction

    # Tile the flattened spatial axis so the live f32 accumulator / im2col
    # scratch stay small at large images; one fat tile at small images.
    MAX_TILE = 1024
    TILE_M = Mout
    if Mout > MAX_TILE:
        TILE_M = MAX_TILE
        while Mout % TILE_M:
            TILE_M -= 128
    n_m = Mout // TILE_M

    # --- parameter glue: weight normalization (per output channel) ---
    vnorm = jnp.sqrt(jnp.sum(v * v, axis=(1, 2, 3), keepdims=True))
    w = g.reshape(O, 1, 1, 1) * v / vnorm              # (O, C, K, K) f32
    # Contraction index ((dy*K + dx)*C + c) must match the im2col scratch rows.
    w_flat = jnp.transpose(w, (0, 2, 3, 1)).reshape(O, K * K * C).astype(jnp.bfloat16)

    # --- glue: zero-pad + flatten (row stride Wcols).  Extra bottom rows / right
    #     columns keep every shifted slice in-bounds; they only feed junk columns.
    Tin_needed = Mout + (K - 1) * Wcols + (K - 1)
    Hrows = -(-Tin_needed // Wcols)                    # ceil
    xp = jnp.pad(x, ((0, 0), (0, 0), (p, Hrows - H - p), (p, Wcols - W - p)))
    Tin = Hrows * Wcols
    xf = xp.reshape(N, C, Tin).astype(jnp.bfloat16)
    b2 = b.reshape(O, 1).astype(jnp.float32)

    kernel = functools.partial(fused_conv_kernel, K=K, C=C, Wcols=Wcols,
                               TILE_M=TILE_M, n_m=n_m)
    out_flat = pl.pallas_call(
        kernel,
        out_shape=jax.ShapeDtypeStruct((N, O, Mout), jnp.bfloat16),
        grid_spec=pltpu.PrefetchScalarGridSpec(
            num_scalar_prefetch=0,
            grid=(N, n_m),
            in_specs=[
                pl.BlockSpec((None, C, Tin), lambda n, m: (n, 0, 0)),   # whole image; reused over m
                pl.BlockSpec((O, K * K * C), lambda n, m: (0, 0)),      # weights, resident
                pl.BlockSpec((O, 1), lambda n, m: (0, 0)),              # bias, resident
            ],
            out_specs=pl.BlockSpec((None, O, TILE_M), lambda n, m: (n, 0, m)),
            scratch_shapes=[pltpu.VMEM((K * K * C, TILE_M), jnp.bfloat16)],
        ),
        compiler_params=pltpu.CompilerParams(
            dimension_semantics=("parallel", "parallel"),   # batch / spatial tiles across TCs
            vmem_limit_bytes=32 * 1024 * 1024,
        ),
    )(xf, w_flat, b2)

    # (N, O, Ho*Wcols) -> NCHW: split the spatial axis and drop the junk columns.
    # NOTE: out_flat must NOT be consumed without this crop (junk columns).
    out = out_flat.reshape(N, O, Ho, Wcols)[:, :, :, :Wo]
    return out


def _reference(x, v, g, b, *, stride=1, pad=True):
    """Pure-JAX f32 reference for correctness checking."""
    O, C, K, _ = v.shape
    vnorm = jnp.sqrt(jnp.sum(v * v, axis=(1, 2, 3), keepdims=True))
    w = g.reshape(O, 1, 1, 1) * v / vnorm
    p = K // 2 if pad else 0
    y = jax.lax.conv_general_dilated(
        x, w, window_strides=(stride, stride),
        padding=[(p, p), (p, p)],
        dimension_numbers=("NCHW", "OIHW", "NCHW"))
    y = y + b.reshape(1, O, 1, 1)
    y = jnp.where(y >= 0.0, y, 0.2 * y)
    denom = jnp.sqrt(jnp.mean(y * y, axis=1, keepdims=True) + 1e-8)
    return y / denom


if __name__ == "__main__":
    key = jax.random.PRNGKey(0)
    k_x, k_v, k_b = jax.random.split(key, 3)

    N, C, H, W = 2, 4, 16, 16        # tensor_size = (1, 4, 16, 16)-style input
    O, K = 8, 3                      # out_channels=8, filter_size=3, stride=1, pad=True

    x = jax.random.normal(k_x, (N, C, H, W), dtype=jnp.float32)
    v = jax.random.normal(k_v, (O, C, K, K), dtype=jnp.float32)
    g = jnp.ones((O,), dtype=jnp.float32)
    b = 0.1 * jax.random.normal(k_b, (O,), dtype=jnp.float32)

    out = conv_convt_forward(x, v, g, b, stride=1, pad=True)
    out = jax.block_until_ready(out)

    ref = _reference(x, v, g, b, stride=1, pad=True)
    assert out.shape == (N, O, H, W), out.shape
    # bf16 matmul operands + bf16 output with f32 accumulate -> bf16-level tolerance.
    err = float(jnp.max(jnp.abs(out.astype(jnp.float32) - ref)))
    assert err < 5e-2, err

    print("KERNEL_OK")
</pallas_src>

<mosaic_0001>
module attributes {stable_mosaic.version = 11 : i64} {
  func.func @fused_conv_kernel(%arg0: i32, %arg1: i32, %arg2: memref<1x4x456xbf16, #tpu.memory_space<vmem>>, %arg3: memref<8x36xbf16, #tpu.memory_space<vmem>>, %arg4: memref<8x1xf32, #tpu.memory_space<vmem>>, %arg5: memref<1x8x384xbf16, #tpu.memory_space<vmem>>, %arg6: memref<36x384xbf16, #tpu.memory_space<vmem>>) attributes {dimension_semantics = [#tpu.dimension_semantics<parallel>, #tpu.dimension_semantics<parallel>], iteration_bounds = array<i64: 2, 1>, scalar_prefetch = 0 : i64, scratch_operands = 1 : i64, tpu.core_type = #tpu.core_type<tc>, window_params = [{transform_indices = @transform_0, window_bounds = array<i64: 1, 4, 456>}, {pipeline_mode = #tpu.pipeline_mode<synchronous>, transform_indices = @transform_1, window_bounds = array<i64: 8, 36>}, {pipeline_mode = #tpu.pipeline_mode<synchronous>, transform_indices = @transform_2, window_bounds = array<i64: 8, 1>}, {transform_indices = @transform_3, window_bounds = array<i64: 1, 8, 384>}]} {
    %c0 = arith.constant 0 : index
    %c0_0 = arith.constant 0 : index
    %c0_1 = arith.constant 0 : index
    %0 = vector.load %arg2[%c0, %c0_0, %c0_1] : memref<1x4x456xbf16, #tpu.memory_space<vmem>>, vector<1x4x384xbf16>
    %1 = vector.shape_cast %0 : vector<1x4x384xbf16> to vector<4x384xbf16>
    %c0_2 = arith.constant 0 : index
    %c0_3 = arith.constant 0 : index
    %2 = vector.load %arg6[%c0_2, %c0_3] : memref<36x384xbf16, #tpu.memory_space<vmem>>, vector<4x384xbf16>
    tpu.vector_store %arg6[%c0_2, %c0_3], %1 {strides = array<i32>} : memref<36x384xbf16, #tpu.memory_space<vmem>>, vector<4x384xbf16>,
    %c0_4 = arith.constant 0 : index
    %c0_5 = arith.constant 0 : index
    %c1 = arith.constant 1 : index
    %3 = vector.load %arg2[%c0_4, %c0_5, %c1] : memref<1x4x456xbf16, #tpu.memory_space<vmem>>, vector<1x4x384xbf16>
    %4 = vector.shape_cast %3 : vector<1x4x384xbf16> to vector<4x384xbf16>
    %c4 = arith.constant 4 : index
    %c0_6 = arith.constant 0 : index
    %5 = vector.load %arg6[%c4, %c0_6] : memref<36x384xbf16, #tpu.memory_space<vmem>>, vector<4x384xbf16>
    tpu.vector_store %arg6[%c4, %c0_6], %4 {strides = array<i32>} : memref<36x384xbf16, #tpu.memory_space<vmem>>, vector<4x384xbf16>,
    %c0_7 = arith.constant 0 : index
    %c0_8 = arith.constant 0 : index
    %c2 = arith.constant 2 : index
    %6 = vector.load %arg2[%c0_7, %c0_8, %c2] : memref<1x4x456xbf16, #tpu.memory_space<vmem>>, vector<1x4x384xbf16>
    %7 = vector.shape_cast %6 : vector<1x4x384xbf16> to vector<4x384xbf16>
    %c8 = arith.constant 8 : index
    %c0_9 = arith.constant 0 : index
    %8 = vector.load %arg6[%c8, %c0_9] : memref<36x384xbf16, #tpu.memory_space<vmem>>, vector<4x384xbf16>
    tpu.vector_store %arg6[%c8, %c0_9], %7 {strides = array<i32>} : memref<36x384xbf16, #tpu.memory_space<vmem>>, vector<4x384xbf16>,
    %c0_10 = arith.constant 0 : index
    %c0_11 = arith.constant 0 : index
    %c24 = arith.constant 24 : index
    %9 = vector.load %arg2[%c0_10, %c0_11, %c24] : memref<1x4x456xbf16, #tpu.memory_space<vmem>>, vector<1x4x384xbf16>
    %10 = vector.shape_cast %9 : vector<1x4x384xbf16> to vector<4x384xbf16>
    %c12 = arith.constant 12 : index
    %c0_12 = arith.constant 0 : index
    %11 = vector.load %arg6[%c12, %c0_12] : memref<36x384xbf16, #tpu.memory_space<vmem>>, vector<4x384xbf16>
    tpu.vector_store %arg6[%c12, %c0_12], %10 {strides = array<i32>} : memref<36x384xbf16, #tpu.memory_space<vmem>>, vector<4x384xbf16>,
    %c0_13 = arith.constant 0 : index
    %c0_14 = arith.constant 0 : index
    %c25 = arith.constant 25 : index
    %12 = vector.load %arg2[%c0_13, %c0_14, %c25] : memref<1x4x456xbf16, #tpu.memory_space<vmem>>, vector<1x4x384xbf16>
    %13 = vector.shape_cast %12 : vector<1x4x384xbf16> to vector<4x384xbf16>
    %c16 = arith.constant 16 : index
    %c0_15 = arith.constant 0 : index
    %14 = vector.load %arg6[%c16, %c0_15] : memref<36x384xbf16, #tpu.memory_space<vmem>>, vector<4x384xbf16>
    tpu.vector_store %arg6[%c16, %c0_15], %13 {strides = array<i32>} : memref<36x384xbf16, #tpu.memory_space<vmem>>, vector<4x384xbf16>,
    %c0_16 = arith.constant 0 : index
    %c0_17 = arith.constant 0 : index
    %c26 = arith.constant 26 : index
    %15 = vector.load %arg2[%c0_16, %c0_17, %c26] : memref<1x4x456xbf16, #tpu.memory_space<vmem>>, vector<1x4x384xbf16>
    %16 = vector.shape_cast %15 : vector<1x4x384xbf16> to vector<4x384xbf16>
    %c20 = arith.constant 20 : index
    %c0_18 = arith.constant 0 : index
    %17 = vector.load %arg6[%c20, %c0_18] : memref<36x384xbf16, #tpu.memory_space<vmem>>, vector<4x384xbf16>
    tpu.vector_store %arg6[%c20, %c0_18], %16 {strides = array<i32>} : memref<36x384xbf16, #tpu.memory_space<vmem>>, vector<4x384xbf16>,
    %c0_19 = arith.constant 0 : index
    %c0_20 = arith.constant 0 : index
    %c48 = arith.constant 48 : index
    %18 = vector.load %arg2[%c0_19, %c0_20, %c48] : memref<1x4x456xbf16, #tpu.memory_space<vmem>>, vector<1x4x384xbf16>
    %19 = vector.shape_cast %18 : vector<1x4x384xbf16> to vector<4x384xbf16>
    %c24_21 = arith.constant 24 : index
    %c0_22 = arith.constant 0 : index
    %20 = vector.load %arg6[%c24_21, %c0_22] : memref<36x384xbf16, #tpu.memory_space<vmem>>, vector<4x384xbf16>
    tpu.vector_store %arg6[%c24_21, %c0_22], %19 {strides = array<i32>} : memref<36x384xbf16, #tpu.memory_space<vmem>>, vector<4x384xbf16>,
    %c0_23 = arith.constant 0 : index
    %c0_24 = arith.constant 0 : index
    %c49 = arith.constant 49 : index
    %21 = vector.load %arg2[%c0_23, %c0_24, %c49] : memref<1x4x456xbf16, #tpu.memory_space<vmem>>, vector<1x4x384xbf16>
    %22 = vector.shape_cast %21 : vector<1x4x384xbf16> to vector<4x384xbf16>
    %c28 = arith.constant 28 : index
    %c0_25 = arith.constant 0 : index
    %23 = vector.load %arg6[%c28, %c0_25] : memref<36x384xbf16, #tpu.memory_space<vmem>>, vector<4x384xbf16>
    tpu.vector_store %arg6[%c28, %c0_25], %22 {strides = array<i32>} : memref<36x384xbf16, #tpu.memory_space<vmem>>, vector<4x384xbf16>,
    %c0_26 = arith.constant 0 : index
    %c0_27 = arith.constant 0 : index
    %c50 = arith.constant 50 : index
    %24 = vector.load %arg2[%c0_26, %c0_27, %c50] : memref<1x4x456xbf16, #tpu.memory_space<vmem>>, vector<1x4x384xbf16>
    %25 = vector.shape_cast %24 : vector<1x4x384xbf16> to vector<4x384xbf16>
    %c32 = arith.constant 32 : index
    %c0_28 = arith.constant 0 : index
    %26 = vector.load %arg6[%c32, %c0_28] : memref<36x384xbf16, #tpu.memory_space<vmem>>, vector<4x384xbf16>
    tpu.vector_store %arg6[%c32, %c0_28], %25 {strides = array<i32>} : memref<36x384xbf16, #tpu.memory_space<vmem>>, vector<4x384xbf16>,
    %c0_29 = arith.constant 0 : index
    %c0_30 = arith.constant 0 : index
    %27 = vector.load %arg3[%c0_29, %c0_30] : memref<8x36xbf16, #tpu.memory_space<vmem>>, vector<8x36xbf16>
    %c0_31 = arith.constant 0 : index
    %c0_32 = arith.constant 0 : index
    %28 = vector.load %arg6[%c0_31, %c0_32] : memref<36x384xbf16, #tpu.memory_space<vmem>>, vector<36x384xbf16>
    %cst = arith.constant dense<0.000000e+00> : vector<8x384xf32>
    %29 = tpu.matmul %27, %28, %cst {dimension_numbers = #tpu.dot_dimension_numbers<[1], [0], [0], [1], [0, 0, 1, 1], [], []>} : vector<8x36xbf16>, vector<36x384xbf16>, vector<8x384xf32> -> vector<8x384xf32>
    %c0_33 = arith.constant 0 : index
    %c0_34 = arith.constant 0 : index
    %30 = vector.load %arg4[%c0_33, %c0_34] : memref<8x1xf32, #tpu.memory_space<vmem>>, vector<8x1xf32>
    %31 = vector.broadcast %30 : vector<8x1xf32> to vector<8x384xf32>
    %32 = arith.addf %29, %31 : vector<8x384xf32>
    %cst_35 = arith.constant 0.000000e+00 : f32
    %33 = vector.broadcast %cst_35 : f32 to vector<8x384xf32>
    %34 = arith.cmpf oge, %32, %33 : vector<8x384xf32>
    %cst_36 = arith.constant 2.000000e-01 : f32
    %35 = vector.broadcast %cst_36 : f32 to vector<8x384xf32>
    %36 = arith.mulf %35, %32 : vector<8x384xf32>
    %37 = arith.select %34, %32, %36 : vector<8x384xi1>, vector<8x384xf32>
    %38 = arith.mulf %37, %37 : vector<8x384xf32>
    %cst_37 = arith.constant dense<0.000000e+00> : vector<384xf32>
    %39 = vector.multi_reduction <add>, %38, %cst_37 [0] : vector<8x384xf32> to vector<384xf32>
    %40 = vector.shape_cast %39 : vector<384xf32> to vector<1x384xf32>
    %cst_38 = arith.constant 8.000000e+00 : f32
    %41 = vector.broadcast %cst_38 : f32 to vector<1x384xf32>
    %42 = arith.divf %40, %41 : vector<1x384xf32>
    %cst_39 = arith.constant 9.99999993E-9 : f32
    %43 = vector.broadcast %cst_39 : f32 to vector<1x384xf32>
    %44 = arith.addf %42, %43 : vector<1x384xf32>
    %45 = math.rsqrt %44 : vector<1x384xf32>
    %46 = vector.broadcast %45 : vector<1x384xf32> to vector<8x384xf32>
    %47 = arith.mulf %37, %46 : vector<8x384xf32>
    %48 = arith.truncf %47 : vector<8x384xf32> to vector<8x384xbf16>
    %c0_40 = arith.constant 0 : index
    %c0_41 = arith.constant 0 : index
    %c0_42 = arith.constant 0 : index
    %49 = vector.load %arg5[%c0_40, %c0_41, %c0_42] : memref<1x8x384xbf16, #tpu.memory_space<vmem>>, vector<1x8x384xbf16>
    %50 = vector.shape_cast %49 : vector<1x8x384xbf16> to vector<8x384xbf16>
    %51 = vector.shape_cast %48 : vector<8x384xbf16> to vector<1x8x384xbf16>
    tpu.vector_store %arg5[%c0_40, %c0_41, %c0_42], %51 {strides = array<i32>} : memref<1x8x384xbf16, #tpu.memory_space<vmem>>, vector<1x8x384xbf16>,
    return
  }
  func.func @transform_0(%arg0: i32, %arg1: i32) -> (i32, i32, i32) {
    %c0_i32 = arith.constant 0 : i32
    %c0_i32_0 = arith.constant 0 : i32
    %c0_i32_1 = arith.constant 0 : i32
    return %arg0, %c0_i32, %c0_i32_0 : i32, i32, i32
  }
  func.func @transform_1(%arg0: i32, %arg1: i32) -> (i32, i32) {
    %c0_i32 = arith.constant 0 : i32
    %c0_i32_0 = arith.constant 0 : i32
    %c0_i32_1 = arith.constant 0 : i32
    return %c0_i32, %c0_i32_0 : i32, i32
  }
  func.func @transform_2(%arg0: i32, %arg1: i32) -> (i32, i32) {
    %c0_i32 = arith.constant 0 : i32
    %c0_i32_0 = arith.constant 0 : i32
    %c0_i32_1 = arith.constant 0 : i32
    return %c0_i32, %c0_i32_0 : i32, i32
  }
  func.func @transform_3(%arg0: i32, %arg1: i32) -> (i32, i32, i32) {
    %c0_i32 = arith.constant 0 : i32
    %c0_i32_0 = arith.constant 0 : i32
    return %arg0, %c0_i32, %arg1 : i32, i32, i32
  }
}

</mosaic_0001>

<llo_original>
// kernel: tpu_custom_call.1
$region0: #{tpu_custom_call.1}
  #allocation0 [shape = 'u32[]', space=smem, size = 0x4, offset = 0x4, fixed_abs, tag = 'smem constant byte address 0x4 - core index']
  #allocation1 [shape = 'u32[144,128]{1,0:T(1,128)}', space=vmem, size = 0x12000, scoped, tag = 'internal scratch']
  #allocation2 [shape = 'bf16[36,384]{1,0:T(8,128)(2,1)}', space=vmem, size = 0x7800, scoped, tag = 'scratch operand']
  %s0 = inlined_call_operand.hbm [shape: bf16[2,4,456], index: 0, kind: input, shape index: {}]
  %s1 = inlined_call_operand.vmem [shape: bf16[8,36], index: 1, kind: input, shape index: {}]
  %s2 = inlined_call_operand.vmem [shape: f32[8,1], index: 2, kind: input, shape index: {}]
  %s3 = inlined_call_operand.hbm [shape: bf16[2,8,384], index: 3, kind: output, shape index: {}]
  %s4 = sld [smem:[#allocation0]]
  $region49: #{tpu_custom_call.1} parent=0
    _
  %s6 = ssub.s32 1, %s4
  %s7 = scalar_select 0, %s6, %s4
  $region1: #{tpu_custom_call.1} parent=0
    #allocation3 [shape = 'u8[8192]{0}', space=vmem, size = 0x2000, scoped, tag = 'input window, operand 0']
    #allocation4 [shape = 's32[2]{0}', space=sflag, size = 0x8, scoped, tag = 'scoped memory for tpu_custom_call.1']
    #allocation5 [shape = 's32[2]{0}', space=sflag, size = 0x8, scoped, tag = 'scoped memory for tpu_custom_call.1']
    #allocation6 [shape = 'u8[12288]{0}', space=vmem, size = 0x3000, scoped, tag = 'output window, operand 0']
    %8 = vsyncpa [#allocation4], 0
    %s9 = scalar_lea.sflag [#allocation4], 1
    %10 = vsyncpa %s9, 0
    %11 = vsyncpa [#allocation5], 0
    %s12 = scalar_lea.sflag [#allocation5], 1
    %13 = vsyncpa %s12, 0
    loop: start=0, step=1, limit=4
    $region2: #{tpu_custom_call.1} parent=1 // loop_pre_header
      _
    $region3: #{tpu_custom_call.1} parent=1 // loop_header
      %s15 = sphi 0, %s19
      %p16 = scmp.ge.s32.totalorder %s15, 4
      %s22 = sphi 0, %s34
      %s23 = sphi 0, %s30
      %s24 = sphi 0, %s22
      %s25 = sphi 0, %s23
      %s26 = sphi 0, %s24
      %s27 = sphi 0, %s25
      %s37 = sphi 0, %s39
      %s40 = sphi 0, %s37
      %s41 = sphi 0, %s40
      %s57 = sphi 0, %s41
      %s61 = sphi 0, %s61
      %s63 = sphi 0, %s61
      %s64 = sphi 0, %s63
      %s78 = sphi 0, %s64
      %s82 = sphi 0, %s82
      %s84 = sphi 0, %s82
      %s85 = sphi 0, %s84
      %s99 = sphi 0, %s85
      %s107 = sphi 0, %s109
      %s110 = sphi 0, %s107
      %s111 = sphi 0, %s110
      %s127 = sphi 0, %s111
    $region4: #{tpu_custom_call.1} parent=1 // loop_header_branch
      %18 = sbr.rel (%p16) target = $region8
    $region5: #{tpu_custom_call.1} parent=1 // loop_body
      %s20 = ssub.s32 %s15, 1
      %s21 = ssub.s32 %s15, 2
      %s28 = sadd.s32 1, %s23
      %p29 = scmp.ge.s32.totalorder %s28, 1
      %s30 = scalar_select %p29, 0, %s28
      %s31 = sadd.s32 1, %s22
      %s32 = scalar_select %p29, %s31, %s22
      %p33 = scmp.ge.s32.totalorder %s32, 2
      %s34 = scalar_select %p33, 0, %s32
      %s35 = ssub.s32 %s22, %s34
      %p36 = scmp.eq.s32.totalorder %s35, 0
      %s38 = sadd.s32 %s37, 1
      %s39 = scalar_select %p36, %s37, %s38
      %p42 = pneg %p36
      %p43 = scmp.eq.s32.totalorder %s15, 1
      %p44 = por %p42, %p43
      %p45 = scmp.ne.s32.totalorder %s37, %s40
      %p46 = scmp.eq.s32.totalorder %s15, 0
      %p47 = por %p45, %p46
      %p48 = scmp.ne.s32.totalorder %s37, %s40
      %p49 = scmp.eq.s32.totalorder %s20, 1
      %p50 = por %p48, %p49
      %p51 = scmp.ne.s32.totalorder %s40, %s41
      %p52 = scmp.eq.s32.totalorder %s20, 0
      %p53 = por %p51, %p52
      %p54 = scmp.ne.s32.totalorder %s40, %s41
      %p55 = scmp.eq.s32.totalorder %s21, 1
      %p56 = por %p54, %p55
      %p58 = scmp.ne.s32.totalorder %s41, %s57
      %p59 = scmp.eq.s32.totalorder %s21, 0
      %p60 = por %p58, %p59
      %s62 = sadd.s32 %s61, 1
      %p65 = scmp.eq.s32.totalorder %s15, 1
      %p66 = scmp.ne.s32.totalorder %s61, %s63
      %p67 = scmp.eq.s32.totalorder %s15, 0
      %p68 = por %p66, %p67
      %p69 = scmp.ne.s32.totalorder %s61, %s63
      %p70 = scmp.eq.s32.totalorder %s20, 1
      %p71 = por %p69, %p70
      %p72 = scmp.ne.s32.totalorder %s63, %s64
      %p73 = scmp.eq.s32.totalorder %s20, 0
      %p74 = por %p72, %p73
      %p75 = scmp.ne.s32.totalorder %s63, %s64
      %p76 = scmp.eq.s32.totalorder %s21, 1
      %p77 = por %p75, %p76
      %p79 = scmp.ne.s32.totalorder %s64, %s78
      %p80 = scmp.eq.s32.totalorder %s21, 0
      %p81 = por %p79, %p80
      %s83 = sadd.s32 %s82, 1
      %p86 = scmp.eq.s32.totalorder %s15, 1
      %p87 = scmp.ne.s32.totalorder %s82, %s84
      %p88 = scmp.eq.s32.totalorder %s15, 0
      %p89 = por %p87, %p88
      %p90 = scmp.ne.s32.totalorder %s82, %s84
      %p91 = scmp.eq.s32.totalorder %s20, 1
      %p92 = por %p90, %p91
      %p93 = scmp.ne.s32.totalorder %s84, %s85
      %p94 = scmp.eq.s32.totalorder %s20, 0
      %p95 = por %p93, %p94
      %p96 = scmp.ne.s32.totalorder %s84, %s85
      %p97 = scmp.eq.s32.totalorder %s21, 1
      %p98 = por %p96, %p97
      %p100 = scmp.ne.s32.totalorder %s85, %s99
      %p101 = scmp.eq.s32.totalorder %s21, 0
      %p102 = por %p100, %p101
      %s103 = ssub.s32 %s22, %s34
      %s104 = ssub.s32 %s23, %s30
      %s105 = sor.u32 %s103, %s104
      %p106 = scmp.eq.s32.totalorder %s105, 0
      %s108 = sadd.s32 %s107, 1
      %s109 = scalar_select %p106, %s107, %s108
      %p112 = pneg %p106
      %p113 = scmp.eq.s32.totalorder %s15, 1
      %p114 = por %p112, %p113
      %p115 = scmp.ne.s32.totalorder %s107, %s110
      %p116 = scmp.eq.s32.totalorder %s15, 0
      %p117 = por %p115, %p116
      %p118 = scmp.ne.s32.totalorder %s107, %s110
      %p119 = scmp.eq.s32.totalorder %s20, 1
      %p120 = por %p118, %p119
      %p121 = scmp.ne.s32.totalorder %s110, %s111
      %p122 = scmp.eq.s32.totalorder %s20, 0
      %p123 = por %p121, %p122
      %p124 = scmp.ne.s32.totalorder %s110, %s111
      %p125 = scmp.eq.s32.totalorder %s21, 1
      %p126 = por %p124, %p125
      %p128 = scmp.ne.s32.totalorder %s111, %s127
      %p129 = scmp.eq.s32.totalorder %s21, 0
      %p130 = por %p128, %p129
      %p131 = scmp.le.s32.totalorder 1, %s15
      %p132 = scmp.lt.s32.totalorder %s15, 3
      %p133 = pnand %p131, %p132
      %p134 = pneg %p133
      // Predicated region
      $region9: #{tpu_custom_call.1} parent=5 // pred_check
        _
      $region10: #{tpu_custom_call.1} parent=5 // pred_check_branch
        %136 = sbr.rel (%p133) target = $region12
      $region11: #{tpu_custom_call.1} parent=5 // pred_region
        %s137 = ssub.s32 %s15, 1
        // Predicated region
        $region13: #{tpu_custom_call.1} parent=11 // pred_check
          %p138 = pneg %p74
        $region14: #{tpu_custom_call.1} parent=11 // pred_check_branch
          %140 = sbr.rel (%p138) target = $region16
        $region15: #{tpu_custom_call.1} parent=11 // pred_region
          _
        $region16: #{tpu_custom_call.1} parent=11 // pred_fallthru
          _
        // Predicated region
        $region17: #{tpu_custom_call.1} parent=11 // pred_check
          %p141 = pneg %p95
        $region18: #{tpu_custom_call.1} parent=11 // pred_check_branch
          %143 = sbr.rel (%p141) target = $region20
        $region19: #{tpu_custom_call.1} parent=11 // pred_region
          _
        $region20: #{tpu_custom_call.1} parent=11 // pred_fallthru
          _
      $region12: #{tpu_custom_call.1} parent=5 // pred_fallthru
        _
      %p144 = scmp.lt.s32.totalorder %s15, 2
      // Predicated region
      $region21: #{tpu_custom_call.1} parent=5 // pred_check
        %p145 = pneg %p144
      $region22: #{tpu_custom_call.1} parent=5 // pred_check_branch
        %147 = sbr.rel (%p145) target = $region24
      $region23: #{tpu_custom_call.1} parent=5 // pred_region
        // Predicated region
        $region25: #{tpu_custom_call.1} parent=23 // pred_check
          %p148 = pneg %p47
        $region26: #{tpu_custom_call.1} parent=23 // pred_check_branch
          %150 = sbr.rel (%p148) target = $region28
        $region27: #{tpu_custom_call.1} parent=23 // pred_region
          %s151 = sand.u32 %s37, 1
          %s152 = scalar_lea.sflag [#allocation4], %s151
          %s153 = sand.u32 %s37, 1
          %s154 = smul.addr %s153, 8
          %s155 = scalar_lea.vmem [#allocation3], %s154
          %s157 = ssub.s32 128, 128
          %158 = vsyncadd %s152, %s157
          %s159 = smul.addr %s22, 4
          %s160 = smul.addr %s159, 32
          %s161 = scalar_lea.hbm %s0, %s160
          %s163 = sshll.u32 %s155, 4
          %s164 = int_to_ptr.vmem [resolvable:$true] %s163
          %166 = dma.hbm_to_vmem [thread:$0]  %s161, 128, %s164, %s152
        $region28: #{tpu_custom_call.1} parent=23 // pred_fallthru
          _
      $region24: #{tpu_custom_call.1} parent=5 // pred_fallthru
        _
      %p167 = scmp.le.s32.totalorder 1, %s15
      %p168 = scmp.lt.s32.totalorder %s15, 3
      %p169 = pnand %p167, %p168
      %p170 = pneg %p169
      // Predicated region
      $region29: #{tpu_custom_call.1} parent=5 // pred_check
        _
      $region30: #{tpu_custom_call.1} parent=5 // pred_check_branch
        %172 = sbr.rel (%p169) target = $region32
      $region31: #{tpu_custom_call.1} parent=5 // pred_region
        %s173 = ssub.s32 %s15, 1
        %s174 = sand.u32 %s40, 1
        %s175 = scalar_lea.sflag [#allocation4], %s174
        %s176 = sand.u32 %s40, 1
        %s177 = smul.addr %s176, 8
        %s178 = scalar_lea.vmem [#allocation3], %s177
        // Predicated region
        $region33: #{tpu_custom_call.1} parent=31 // pred_check
          %p179 = pneg %p53
        $region34: #{tpu_custom_call.1} parent=31 // pred_check_branch
          %181 = sbr.rel (%p179) target = $region36
        $region35: #{tpu_custom_call.1} parent=31 // pred_region
          %182 = dma.done %s175, 128
        $region36: #{tpu_custom_call.1} parent=31 // pred_fallthru
          _
        %s183 = sand.u32 %s40, 1
        %s184 = scalar_lea.sflag [#allocation4], %s183
        %s185 = sand.u32 %s40, 1
        %s186 = smul.addr %s185, 8
        %s187 = scalar_lea.vmem [#allocation3], %s186
        %p188 = pneg %p53
        %p189 = pneg %p50
        %p190 = pneg %p74
        %p191 = pneg %p71
        %p192 = pneg %p95
        %p193 = pneg %p92
        %p194 = pneg %p123
        %p195 = pneg %p120
        %s196 = sand.u32 %s110, 1
        %s197 = scalar_lea.sflag [#allocation5], %s196
        %s198 = sand.u32 %s110, 1
        %s199 = smul.addr %s198, 12
        %s200 = scalar_lea.vmem [#allocation6], %s199
        %s201 = smul.u32 3, %s25
        %v203 = vld [vmem:[%s178] sm:$0x3f]
        %v205 = vcombine.high %v203, %v203
        %v207 = vunpack.c.l.s4 1983009808
        %v208 = vunpack.c.0.s8 %v207
        %v209 = vlaneseq
        %v210 = vshrl.u32 %v209, 7
        %v211 = vsub.s32 %v208, %v210
        %v212 = vrot.slane %v203, %v211
        %v214 = vunpack.c.l.s4 1983009808
        %v215 = vunpack.c.0.s8 %v214
        %v216 = vlaneseq
        %v217 = vshrl.u32 %v216, 7
        %v218 = vsub.s32 %v215, %v217
        %v219 = vrot.slane %v205, %v218
        %222 = vst [vmem:[#allocation2] sm:$0x33] %v212
        %223 = vst [vmem:[#allocation2 + $0x8] sm:$0x3] %v219
        %v224 = vld [vmem:[%s178] sm:$0xff]
        %v226 = vcombine.low %v224, %v224
        %v228 = vunpack.c.l.s4 1983009808
        %v229 = vunpack.c.0.s8 %v228
        %v230 = vlaneseq
        %v231 = vshrl.u32 %v230, 7
        %v232 = vsub.s32 %v229, %v231
        %v233 = vrot.slane %v226, %v232
        %v235 = vunpack.c.l.s4 1983009808
        %v236 = vunpack.c.0.s8 %v235
        %v237 = vlaneseq
        %v238 = vshrl.u32 %v237, 7
        %v239 = vsub.s32 %v236, %v238
        %v240 = vrot.slane %v224, %v239
        %241 = vrot.lane.b32.xlu0 %v233, 127
        %v242 = vpop.permute.xlu0 %241
        %243 = vrot.lane.b32.xlu0 %v240, 127
        %v244 = vpop.permute.xlu0 %243
        %v245 = vrot.slane %v242, 4
        %v246 = vrot.slane %v244, 4
        %vm247 = vcmask 1043456
        %v248 = vsel %vm247, %v245, %v246
        %vm249 = vcmask 1039360
        %v250 = vsel %vm249, %v242, %v248
        %v251 = vsel %vm249, %v244, %v246
        %254 = vst [vmem:[#allocation2] sm:$0xcc] %v250
        %255 = vst [vmem:[#allocation2 + $0x8] sm:$0xc] %v251
        %v256 = vld [vmem:[%s178] sm:$0xff]
        %v258 = vcombine.high %v256, %v256
        %v260 = vunpack.c.l.s4 1983009808
        %v261 = vunpack.c.0.s8 %v260
        %v262 = vlaneseq
        %v263 = vshrl.u32 %v262, 7
        %v264 = vsub.s32 %v261, %v263
        %v265 = vrot.slane %v256, %v264
        %v267 = vunpack.c.l.s4 1983009808
        %v268 = vunpack.c.0.s8 %v267
        %v269 = vlaneseq
        %v270 = vshrl.u32 %v269, 7
        %v271 = vsub.s32 %v268, %v270
        %v272 = vrot.slane %v258, %v271
        %273 = vrot.lane.b32.xlu0 %v265, 126
        %v274 = vpop.permute.xlu0 %273
        %275 = vrot.lane.b32.xlu0 %v272, 126
        %v276 = vpop.permute.xlu0 %275
        %v277 = vrot.slane %v274, 4
        %v278 = vrot.slane %v276, 4
        %v279 = vsel %vm247, %v277, %v278
        %vm280 = vcmask 1031168
        %v281 = vsel %vm280, %v274, %v279
        %v282 = vsel %vm280, %v276, %v278
        %285 = vst [vmem:[#allocation2 + $0xc] sm:$0x33] %v281
        %286 = vst [vmem:[#allocation2 + $0x14] sm:$0x3] %v282
        %v287 = vld [vmem:[%s178] sm:$0xff]
        %v289 = vcombine.low %v287, %v287
        %v291 = vunpack.c.l.s4 1983009808
        %v292 = vunpack.c.0.s8 %v291
        %v293 = vlaneseq
        %v294 = vshrl.u32 %v293, 7
        %v295 = vsub.s32 %v292, %v294
        %v296 = vrot.slane %v289, %v295
        %v298 = vunpack.c.l.s4 1983009808
        %v299 = vunpack.c.0.s8 %v298
        %v300 = vlaneseq
        %v301 = vshrl.u32 %v300, 7
        %v302 = vsub.s32 %v299, %v301
        %v303 = vrot.slane %v287, %v302
        %304 = vrot.lane.b32.xlu0 %v296, 104
        %v305 = vpop.permute.xlu0 %304
        %306 = vrot.lane.b32.xlu0 %v303, 104
        %v307 = vpop.permute.xlu0 %306
        %v308 = vrot.slane %v305, 4
        %v309 = vrot.slane %v307, 4
        %v310 = vsel %vm247, %v308, %v309
        %vm311 = vcmask 850944
        %v312 = vsel %vm311, %v305, %v310
        %v313 = vsel %vm311, %v307, %v309
        %316 = vst [vmem:[#allocation2 + $0xc] sm:$0xcc] %v312
        %317 = vst [vmem:[#allocation2 + $0x14] sm:$0xc] %v313
        %v318 = vld [vmem:[%s178] sm:$0xff]
        %v320 = vcombine.high %v318, %v318
        %v322 = vunpack.c.l.s4 1983009808
        %v323 = vunpack.c.0.s8 %v322
        %v324 = vlaneseq
        %v325 = vshrl.u32 %v324, 7
        %v326 = vsub.s32 %v323, %v325
        %v327 = vrot.slane %v318, %v326
        %v329 = vunpack.c.l.s4 1983009808
        %v330 = vunpack.c.0.s8 %v329
        %v331 = vlaneseq
        %v332 = vshrl.u32 %v331, 7
        %v333 = vsub.s32 %v330, %v332
        %v334 = vrot.slane %v320, %v333
        %335 = vrot.lane.b32.xlu0 %v327, 103
        %v336 = vpop.permute.xlu0 %335
        %337 = vrot.lane.b32.xlu0 %v334, 103
        %v338 = vpop.permute.xlu0 %337
        %v339 = vrot.slane %v336, 4
        %v340 = vrot.slane %v338, 4
        %v341 = vsel %vm247, %v339, %v340
        %vm342 = vcmask 842752
        %v343 = vsel %vm342, %v336, %v341
        %v344 = vsel %vm342, %v338, %v340
        %347 = vst [vmem:[#allocation2 + $0x18] sm:$0x33] %v343
        %348 = vst [vmem:[#allocation2 + $0x20] sm:$0x3] %v344
        %v349 = vld [vmem:[%s178] sm:$0xff]
        %v351 = vcombine.low %v349, %v349
        %v353 = vunpack.c.l.s4 1983009808
        %v354 = vunpack.c.0.s8 %v353
        %v355 = vlaneseq
        %v356 = vshrl.u32 %v355, 7
        %v357 = vsub.s32 %v354, %v356
        %v358 = vrot.slane %v351, %v357
        %v360 = vunpack.c.l.s4 1983009808
        %v361 = vunpack.c.0.s8 %v360
        %v362 = vlaneseq
        %v363 = vshrl.u32 %v362, 7
        %v364 = vsub.s32 %v361, %v363
        %v365 = vrot.slane %v349, %v364
        %366 = vrot.lane.b32.xlu0 %v358, 102
        %v367 = vpop.permute.xlu0 %366
        %368 = vrot.lane.b32.xlu0 %v365, 102
        %v369 = vpop.permute.xlu0 %368
        %v370 = vrot.slane %v367, 4
        %v371 = vrot.slane %v369, 4
        %v372 = vsel %vm247, %v370, %v371
        %vm373 = vcmask 834560
        %v374 = vsel %vm373, %v367, %v372
        %v375 = vsel %vm373, %v369, %v371
        %378 = vst [vmem:[#allocation2 + $0x18] sm:$0xcc] %v374
        %379 = vst [vmem:[#allocation2 + $0x20] sm:$0xc] %v375
        %v380 = vld [vmem:[%s178] sm:$0xff]
        %v382 = vcombine.high %v380, %v380
        %v384 = vunpack.c.l.s4 1983009808
        %v385 = vunpack.c.0.s8 %v384
        %v386 = vlaneseq
        %v387 = vshrl.u32 %v386, 7
        %v388 = vsub.s32 %v385, %v387
        %v389 = vrot.slane %v380, %v388
        %v391 = vunpack.c.l.s4 1983009808
        %v392 = vunpack.c.0.s8 %v391
        %v393 = vlaneseq
        %v394 = vshrl.u32 %v393, 7
        %v395 = vsub.s32 %v392, %v394
        %v396 = vrot.slane %v382, %v395
        %397 = vrot.lane.b32.xlu0 %v389, 80
        %v398 = vpop.permute.xlu0 %397
        %399 = vrot.lane.b32.xlu0 %v396, 80
        %v400 = vpop.permute.xlu0 %399
        %v401 = vrot.slane %v398, 4
        %v402 = vrot.slane %v400, 4
        %v403 = vsel %vm247, %v401, %v402
        %vm404 = vcmask 654336
        %v405 = vsel %vm404, %v398, %v403
        %v406 = vsel %vm404, %v400, %v402
        %409 = vst [vmem:[#allocation2 + $0x24] sm:$0x33] %v405
        %410 = vst [vmem:[#allocation2 + $0x2c] sm:$0x3] %v406
        %v411 = vld [vmem:[%s178] sm:$0xff]
        %v413 = vcombine.low %v411, %v411
        %v415 = vunpack.c.l.s4 1983009808
        %v416 = vunpack.c.0.s8 %v415
        %v417 = vlaneseq
        %v418 = vshrl.u32 %v417, 7
        %v419 = vsub.s32 %v416, %v418
        %v420 = vrot.slane %v413, %v419
        %v422 = vunpack.c.l.s4 1983009808
        %v423 = vunpack.c.0.s8 %v422
        %v424 = vlaneseq
        %v425 = vshrl.u32 %v424, 7
        %v426 = vsub.s32 %v423, %v425
        %v427 = vrot.slane %v411, %v426
        %428 = vrot.lane.b32.xlu0 %v420, 79
        %v429 = vpop.permute.xlu0 %428
        %430 = vrot.lane.b32.xlu0 %v427, 79
        %v431 = vpop.permute.xlu0 %430
        %v432 = vrot.slane %v429, 4
        %v433 = vrot.slane %v431, 4
        %v434 = vsel %vm247, %v432, %v433
        %vm435 = vcmask 646144
        %v436 = vsel %vm435, %v429, %v434
        %v437 = vsel %vm435, %v431, %v433
        %440 = vst [vmem:[#allocation2 + $0x24] sm:$0xcc] %v436
        %441 = vst [vmem:[#allocation2 + $0x2c] sm:$0xc] %v437
        %v442 = vld [vmem:[%s178] sm:$0xff]
        %v444 = vcombine.high %v442, %v442
        %v446 = vunpack.c.l.s4 1983009808
        %v447 = vunpack.c.0.s8 %v446
        %v448 = vlaneseq
        %v449 = vshrl.u32 %v448, 7
        %v450 = vsub.s32 %v447, %v449
        %v451 = vrot.slane %v442, %v450
        %v453 = vunpack.c.l.s4 1983009808
        %v454 = vunpack.c.0.s8 %v453
        %v455 = vlaneseq
        %v456 = vshrl.u32 %v455, 7
        %v457 = vsub.s32 %v454, %v456
        %v458 = vrot.slane %v444, %v457
        %459 = vrot.lane.b32.xlu0 %v451, 78
        %v460 = vpop.permute.xlu0 %459
        %461 = vrot.lane.b32.xlu0 %v458, 78
        %v462 = vpop.permute.xlu0 %461
        %v463 = vrot.slane %v460, 4
        %v464 = vrot.slane %v462, 4
        %v465 = vsel %vm247, %v463, %v464
        %vm466 = vcmask 637952
        %v467 = vsel %vm466, %v460, %v465
        %v468 = vsel %vm466, %v462, %v464
        %471 = vst [vmem:[#allocation2 + $0x30] sm:$0x33] %v467
        %472 = vst [vmem:[#allocation2 + $0x38] sm:$0x3] %v468
        %v473 = vld [vmem:[%s1] sm:$0xf]
        %v474 = vld [vmem:[#allocation2] sm:$0xff]
        %v475 = vld [vmem:[#allocation2 + $0x8] sm:$0xf]
        %v476 = vld [vmem:[#allocation2 + $0xc] sm:$0xff]
        %v477 = vld [vmem:[#allocation2 + $0x14] sm:$0xf]
        %v478 = vld [vmem:[#allocation2 + $0x18] sm:$0xff]
        %v479 = vld [vmem:[#allocation2 + $0x20] sm:$0xf]
        %v480 = vld [vmem:[#allocation2 + $0x24] sm:$0xff]
        %v481 = vld [vmem:[#allocation2 + $0x2c] sm:$0xf]
        %v482 = vld [vmem:[#allocation2 + $0x30] sm:$0x33]
        %v483 = vld [vmem:[#allocation2 + $0x38] sm:$0x3]
        %v484 = vld [vmem:[%s2] sm:$0xff]
        %486 = vset.pattern.permute.xlu0 0
        %487 = vperm.xlu0 %486, %v484
        %v488 = vpop.permute.xlu0 %487
        %v500 = vunpack.c.l.b16 %v474
        %v501 = vunpack.c.h.b16 %v474
        %v502 = vunpack.c.l.b16 %v475
        %v503 = vunpack.c.l.b16 %v476
        %v504 = vunpack.c.h.b16 %v476
        %v505 = vunpack.c.l.b16 %v477
        %v506 = vunpack.c.l.b16 %v478
        %v507 = vunpack.c.h.b16 %v478
        %v508 = vunpack.c.l.b16 %v479
        %v509 = vunpack.c.l.b16 %v480
        %v510 = vunpack.c.h.b16 %v480
        %v511 = vunpack.c.l.b16 %v481
        %v512 = vunpack.c.l.b16 %v482
        %v513 = vunpack.c.h.b16 %v482
        %v514 = vunpack.c.l.b16 %v483
        %v515 = vpack.c.b16 %v503, %v500
        %v516 = vpack.c.b16 %v504, %v501
        %v517 = vpack.c.b16 %v505, %v502
        %v518 = vpack.c.b16 %v509, %v506
        %v519 = vpack.c.b16 %v510, %v507
        %v520 = vpack.c.b16 %v511, %v508
        %v521 = vpack.c.b16 %v512, %v512
        %v522 = vpack.c.b16 %v513, %v513
        %v523 = vpack.c.b16 %v514, %v514
        %vm530 = vcmask 293888
        %v532 = vsel %vm530, %v473, 0
        %vm534 = vcmask 1041408
        %v536 = vsel %vm534, %v521, 0
        %v539 = vsel %vm534, %v522, 0
        %v542 = vsel %vm534, %v523, 0
        %544 = vmatprep.subr.bf16.mxu0 %v516
        %545 = vmatpush1.bf16.msra.mxu0 %v515
        %546 = vmatprep.subr.bf16.mxu0 %v519
        %547 = vmatpush1.bf16.msra.mxu0 %v518
        %548 = vmatprep.subr.bf16.mxu0 %v539
        %549 = vmatpush1.bf16.msra.mxu0 %v536
        %550 = vmatprep.subr.bf16.mxu0 0
        %551 = vmatpush1.bf16.msra.mxu0 0
        %552 = vmatprep.subr.bf16.mxu0 0
        %553 = vmatpush1.bf16.msra.mxu0 0
        %554 = vmatprep.subr.bf16.mxu0 0
        %555 = vmatpush1.bf16.msra.mxu0 0
        %556 = vmatprep.subr.bf16.mxu0 0
        %557 = vmatpush1.bf16.msra.mxu0 0
        %558 = vmatprep.subr.bf16.mxu0 0
        %559 = vmatpush1.bf16.msra.mxu0 0
        %560 = vmatprep.subr.bf16.mxu0 0
        %561 = vmatpush1.bf16.msra.mxu0 0
        %562 = vmatprep.subr.bf16.mxu0 0
        %563 = vmatpush1.bf16.msra.mxu0 0
        %564 = vmatprep.subr.bf16.mxu0 0
        %565 = vmatpush1.bf16.msra.mxu0 0
        %566 = vmatprep.subr.bf16.mxu0 0
        %567 = vmatpush1.bf16.msra.mxu0 0
        %568 = vmatprep.subr.bf16.mxu0 0
        %569 = vmatpush1.bf16.msra.mxu0 0
        %570 = vmatprep.subr.bf16.mxu0 0
        %571 = vmatpush1.bf16.msra.mxu0 0
        %572 = vmatprep.subr.bf16.mxu0 0
        %573 = vmatpush1.bf16.msra.mxu0 0
        %574 = vmatprep.subr.bf16.mxu0 0
        %575 = vmatpush1.bf16.msra.mxu0 0
        %576 = vmatprep.mubr.bf16.mxu0 0
        %577 = vmatmul.mubr.bf16.gmra.mrb[0].mxu0 %v532
        %v578 = vpop.f32.mrb[0].mxu0
        %v579 = vadd.f32 %v488, %v578
        %v580 = vpop.f32.mrb[0].mxu0
        %v581 = vadd.f32 %v488, %v580
        %v582 = vpop.f32.mrb[0].mxu0
        %v583 = vpop.f32.mrb[0].mxu0
        %584 = vdwg.mxu0
        %585 = vmatprep.subr.bf16.mxu0 0
        %586 = vmatpush1.bf16.msra.mxu0 %v517
        %587 = vmatprep.subr.bf16.mxu0 0
        %588 = vmatpush1.bf16.msra.mxu0 %v520
        %589 = vmatprep.subr.bf16.mxu0 0
        %590 = vmatpush1.bf16.msra.mxu0 %v542
        %591 = vmatprep.subr.bf16.mxu0 0
        %592 = vmatpush1.bf16.msra.mxu0 0
        %593 = vmatprep.subr.bf16.mxu0 0
        %594 = vmatpush1.bf16.msra.mxu0 0
        %595 = vmatprep.subr.bf16.mxu0 0
        %596 = vmatpush1.bf16.msra.mxu0 0
        %597 = vmatprep.subr.bf16.mxu0 0
        %598 = vmatpush1.bf16.msra.mxu0 0
        %599 = vmatprep.subr.bf16.mxu0 0
        %600 = vmatpush1.bf16.msra.mxu0 0
        %601 = vmatprep.subr.bf16.mxu0 0
        %602 = vmatpush1.bf16.msra.mxu0 0
        %603 = vmatprep.subr.bf16.mxu0 0
        %604 = vmatpush1.bf16.msra.mxu0 0
        %605 = vmatprep.subr.bf16.mxu0 0
        %606 = vmatpush1.bf16.msra.mxu0 0
        %607 = vmatprep.subr.bf16.mxu0 0
        %608 = vmatpush1.bf16.msra.mxu0 0
        %609 = vmatprep.subr.bf16.mxu0 0
        %610 = vmatpush1.bf16.msra.mxu0 0
        %611 = vmatprep.subr.bf16.mxu0 0
        %612 = vmatpush1.bf16.msra.mxu0 0
        %613 = vmatprep.subr.bf16.mxu0 0
        %614 = vmatpush1.bf16.msra.mxu0 0
        %615 = vmatprep.subr.bf16.mxu0 0
        %616 = vmatpush1.bf16.msra.mxu0 0
        %617 = vmatprep.mubr.bf16.mxu0 0
        %618 = vmatmul.mubr.bf16.gmra.mrb[0].mxu0 %v532
        %v619 = vpop.f32.mrb[0].mxu0
        %v620 = vadd.f32 %v488, %v619
        %v621 = vpop.f32.mrb[0].mxu0
        %v622 = vpop.f32.mrb[0].mxu0
        %v623 = vpop.f32.mrb[0].mxu0
        %624 = vdwg.mxu0
        %vm625 = vcmp.ge.f32.partialorder %v579, 0.0
        %vm626 = vcmp.ge.f32.partialorder %v581, 0.0
        %vm627 = vcmp.ge.f32.partialorder %v620, 0.0
        %v628 = vmul.f32 %v579, 0.2
        %v629 = vmul.f32 %v581, 0.2
        %v630 = vmul.f32 %v620, 0.2
        %v631 = vsel %vm625, %v579, %v628
        %v632 = vsel %vm626, %v581, %v629
        %v633 = vsel %vm627, %v620, %v630
        %v634 = vmul.f32 %v631, %v631
        %v635 = vmul.f32 %v632, %v632
        %v636 = vmul.f32 %v633, %v633
        %v637 = vrot.slane %v634, 4
        %v638 = vadd.f32 %v634, %v637
        %v639 = vrot.slane %v638, 2
        %v640 = vadd.f32 %v638, %v639
        %v641 = vrot.slane %v640, 1
        %v642 = vadd.f32 %v640, %v641
        %v643 = vrot.slane %v635, 4
        %v644 = vadd.f32 %v635, %v643
        %v645 = vrot.slane %v644, 2
        %v646 = vadd.f32 %v644, %v645
        %v647 = vrot.slane %v646, 1
        %v648 = vadd.f32 %v646, %v647
        %v649 = vrot.slane %v636, 4
        %v650 = vadd.f32 %v636, %v649
        %v651 = vrot.slane %v650, 2
        %v652 = vadd.f32 %v650, %v651
        %v653 = vrot.slane %v652, 1
        %v654 = vadd.f32 %v652, %v653
        %v655 = vrcp.pop 8.0
        %v656 = vmul.f32 %v642, %v655
        %v657 = vmul.f32 %v648, %v655
        %v658 = vmul.f32 %v654, %v655
        %v659 = vadd.f32 %v656, 1e-08
        %v660 = vadd.f32 %v657, 1e-08
        %v661 = vadd.f32 %v658, 1e-08
        %v662 = vrsqrt.pop %v659
        %v663 = vrsqrt.pop %v660
        %v664 = vrsqrt.pop %v661
        %v665 = vmul.f32 %v631, %v662
        %v666 = vmul.f32 %v632, %v663
        %v667 = vmul.f32 %v633, %v664
        %v668 = vpack.c.bf16 %v665, %v665
        %v669 = vpack.c.bf16 %v666, %v666
        %v670 = vpack.c.bf16 %v667, %v667
        %v674 = vunpack.c.l.b16 %v668
        %v675 = vunpack.c.l.b16 %v669
        %v676 = vunpack.c.l.b16 %v670
        %v677 = vpack.c.b16 %v675, %v674
        %v678 = vpack.c.b16 %v676, %v676
        %681 = vst [vmem:[%s200] sm:$0xff] %v677
        %682 = vst [vmem:[%s200 + $0x8] sm:$0xf] %v678
        %s683 = sand.u32 %s110, 1
        %s684 = scalar_lea.sflag [#allocation5], %s683
        %s685 = sand.u32 %s110, 1
        %s686 = smul.addr %s685, 12
        %s687 = scalar_lea.vmem [#allocation6], %s686
        // Predicated region
        $region37: #{tpu_custom_call.1} parent=31 // pred_check
          %p688 = pneg %p120
        $region38: #{tpu_custom_call.1} parent=31 // pred_check_branch
          %690 = sbr.rel (%p688) target = $region40
        $region39: #{tpu_custom_call.1} parent=31 // pred_region
          %s691 = smul.u32 3, %s25
          %s693 = ssub.s32 192, 192
          %694 = vsyncadd %s684, %s693
          %s695 = smul.addr %s24, 3
          %s696 = sadd.s32 %s691, %s695
          %s697 = smul.addr %s696, 64
          %s698 = scalar_lea.hbm %s3, %s697
          %s700 = sshll.u32 %s687, 4
          %s701 = int_to_ptr.vmem [resolvable:$true] %s700
          %703 = dma.vmem_to_hbm [thread:$0]  %s701, 192, %s698, %s684
        $region40: #{tpu_custom_call.1} parent=31 // pred_fallthru
          _
      $region32: #{tpu_custom_call.1} parent=5 // pred_fallthru
        _
      %p704 = scmp.le.s32.totalorder 2, %s15
      // Predicated region
      $region41: #{tpu_custom_call.1} parent=5 // pred_check
        %p705 = pneg %p704
      $region42: #{tpu_custom_call.1} parent=5 // pred_check_branch
        %707 = sbr.rel (%p705) target = $region44
      $region43: #{tpu_custom_call.1} parent=5 // pred_region
        %s708 = ssub.s32 %s15, 2
        // Predicated region
        $region45: #{tpu_custom_call.1} parent=43 // pred_check
          %p709 = pneg %p126
        $region46: #{tpu_custom_call.1} parent=43 // pred_check_branch
          %711 = sbr.rel (%p709) target = $region48
        $region47: #{tpu_custom_call.1} parent=43 // pred_region
          %s712 = sand.u32 %s111, 1
          %s713 = scalar_lea.sflag [#allocation5], %s712
          %s714 = sand.u32 %s111, 1
          %s715 = smul.addr %s714, 12
          %s716 = scalar_lea.vmem [#allocation6], %s715
          %717 = dma.done %s713, 192
        $region48: #{tpu_custom_call.1} parent=43 // pred_fallthru
          _
      $region44: #{tpu_custom_call.1} parent=5 // pred_fallthru
        _
    $region6: #{tpu_custom_call.1} parent=1 // loop_footer
      %s19 = sadd.s32 1, %s15
    $region7: #{tpu_custom_call.1} parent=1 // loop_footer_branch
      %14 = sbr.rel target = $region3
    $region8: #{tpu_custom_call.1} parent=1 // loop_exit
      _
    %718 = vsyncpa [#allocation4], 1
    %s719 = scalar_lea.sflag [#allocation4], 1
    %720 = vsyncpa %s719, 1
    %721 = vsyncpa [#allocation5], 1
    %s722 = scalar_lea.sflag [#allocation5], 1
    %723 = vsyncpa %s722, 1

</llo_original>
